<compile_context>
chip_gen: v5e
topology: v5e:2x2
jax: 0.10.0
libtpu: 0.0.40
codegen_flags: <defaults>
</compile_context>

<pallas_src>
import jax
import jax.numpy as jnp
from jax.experimental import pallas as pl
from jax.experimental.pallas import tpu as pltpu

H1 = 512
H2 = 256


def _mapper_kernel(x_ref, w1_ref, b1_ref, w2_ref, b2_ref, w3_ref, b3_ref, o_ref):
    x = x_ref[...]

    # Layer 1: Linear(D, 512) + ReLU.  bf16 MXU operands, f32 accumulate.
    h1 = jnp.dot(x.astype(jnp.bfloat16), w1_ref[...],
                 preferred_element_type=jnp.float32) + b1_ref[...]
    h1 = jnp.maximum(h1, 0.0)

    # Dropout(0.2) -> identity in eval mode.

    # Layer 2: Linear(512, 256) + ReLU.  bf16 MXU operands, f32 accumulate.
    h2 = jnp.dot(h1.astype(jnp.bfloat16), w2_ref[...],
                 preferred_element_type=jnp.float32) + b2_ref[...]
    h2 = jnp.maximum(h2, 0.0)

    # Layer 3: Linear(256, D).  Kept in f32 so the logits (and softmax) stay tight vs spec.
    logits = jnp.dot(h2, w3_ref[...], preferred_element_type=jnp.float32) + b3_ref[...]
    # NOTE: the PyTorch module's `+ 1e-15` on the logits is a softmax shift-invariant
    # no-op (and is below f32 resolution at these magnitudes); deliberately dropped.

    # Numerically stable softmax over the feature (last) axis.
    m = jnp.max(logits, axis=-1, keepdims=True)
    e = jnp.exp(logits - m)
    denom = jnp.sum(e, axis=-1, keepdims=True)
    # EUP approx reciprocal (slot is otherwise idle after the exp) + one Newton step
    # to recover full f32 precision.
    inv = pl.reciprocal(denom, approx=True)
    inv = inv * (2.0 - denom * inv)
    o_ref[...] = (e * inv).astype(o_ref.dtype)


def _round_up(v, m):
    return ((v + m - 1) // m) * m


def _query_vmem_bytes():
    try:
        info = pltpu.get_tpu_info()
        v = getattr(info, "vmem_capacity_bytes", None)
        if v:
            return int(v)
    except Exception:
        pass
    return 64 << 20  # conservative default: v7x per-TensorCore VMEM


_VMEM_BYTES = _query_vmem_bytes()


def _weight_bytes(Dp):
    # w1/w2 bf16, w3 + biases f32, all single-buffered (grid-invariant).
    return 2 * (Dp * H1 + H1 * H2) + 4 * (H2 * Dp) + 4 * (H1 + H2 + Dp)


def _pick_block_b(B, Dp):
    # Budget: leave ~25% headroom of per-core VMEM for compiler-internal scratch / spills.
    budget = int(_VMEM_BYTES * 0.75)
    # Per-row VMEM: double-buffered f32 x + out tiles (16B/elem total) plus the
    # compiler-materialized f32 intermediates (h1, h2, logits, e).
    per_row = 16 * Dp + 4 * (H1 + H2 + 2 * Dp)
    avail = max(budget - _weight_bytes(Dp) - (2 << 20), 1 << 20)
    cap = min(512, max(8, (avail // per_row) // 8 * 8))
    if B >= 16:
        # >=2 grid steps: keeps both v7x TensorCores busy under "parallel" semantics and
        # lets each core's input/output pipeline overlap DMA with compute.
        cap = min(cap, max(8, _round_up(-(-B // 2), 8)))
    blk = min(cap, _round_up(B, 8))
    if blk >= 128:
        blk = (blk // 128) * 128  # align big tiles to the MXU / lane granularity (v5e 4x128)
    return max(8, blk)


@jax.jit
def distribution_mapper(x, prep):
    """x: (B, D) float32. prep: output of prepare_params (padded / bf16-cast weights)."""
    B, D = x.shape
    w1, b1 = prep["w1"], prep["b1"]      # (Dp, 512) bf16, (1, 512) f32
    w2, b2 = prep["w2"], prep["b2"]      # (512, 256) bf16, (1, 256) f32
    w3, b3 = prep["w3"], prep["b3"]      # (256, Dp) f32, (1, Dp) f32
    Dp = w1.shape[0]

    # Keep the output lane-dense: the feature dim was padded to a multiple of 128 at
    # prepare_params time (weights).  Only the cheap x pad / output slice runs per call.
    if Dp != D:
        x = jnp.pad(x, ((0, 0), (0, Dp - D)))

    block_b = _pick_block_b(B, Dp)
    grid = (pl.cdiv(B, block_b),)

    # Weights/biases are grid-invariant (constant index_map): single-buffer them so they
    # are DMA'd once and don't pay the 2x double-buffer VMEM footprint.
    def const_spec(shape):
        return pl.BlockSpec(shape, lambda i: (0,) * len(shape),
                            pipeline_mode=pl.Buffered(1))

    # Explicit scoped-VMEM limit: resident weights + double-buffered x/out tiles +
    # materialized intermediates + margin, clamped to the physical per-core capacity.
    needed = (_weight_bytes(Dp)
              + 2 * 2 * block_b * Dp * 4
              + block_b * (H1 + H2 + 2 * Dp) * 4
              + (4 << 20))
    vmem_limit = int(min(max(needed, 32 << 20), int(_VMEM_BYTES * 0.9)))

    cost = pl.CostEstimate(
        flops=2 * B * (Dp * H1 + H1 * H2 + H2 * Dp),
        transcendentals=B * Dp,
        bytes_accessed=(4 * B * Dp * 2                      # x in, probs out (f32)
                        + 2 * (Dp * H1 + H1 * H2)            # bf16 weights
                        + 4 * (H2 * Dp + H1 + H2 + Dp)),     # f32 w3 + biases
    )

    out = pl.pallas_call(
        _mapper_kernel,
        out_shape=jax.ShapeDtypeStruct((B, Dp), jnp.float32),
        grid_spec=pltpu.PrefetchScalarGridSpec(
            num_scalar_prefetch=0,
            grid=grid,
            in_specs=[
                pl.BlockSpec((block_b, Dp), lambda i: (i, 0)),   # x tile (pipelined)
                const_spec((Dp, H1)),                            # w1 (resident, bf16)
                const_spec((1, H1)),                             # b1
                const_spec((H1, H2)),                            # w2 (resident, bf16)
                const_spec((1, H2)),                             # b2
                const_spec((H2, Dp)),                            # w3 (resident, f32)
                const_spec((1, Dp)),                             # b3
            ],
            out_specs=pl.BlockSpec((block_b, Dp), lambda i: (i, 0)),
        ),
        compiler_params=pltpu.CompilerParams(
            dimension_semantics=("parallel",),
            vmem_limit_bytes=vmem_limit),
        cost_estimate=cost,
    )(x, w1, b1, w2, b2, w3, b3)

    if Dp != D:
        out = out[:, :D]
    return out


def init_params(key, input_dim):
    """Deterministic init mimicking nn.Linear default: U(-1/sqrt(fan_in), +1/sqrt(fan_in))."""
    ks = jax.random.split(key, 6)

    def linear(kw, kb, fan_in, fan_out):
        bound = 1.0 / jnp.sqrt(fan_in)
        w = jax.random.uniform(kw, (fan_in, fan_out), jnp.float32, -bound, bound)
        b = jax.random.uniform(kb, (1, fan_out), jnp.float32, -bound, bound)
        return w, b

    w1, b1 = linear(ks[0], ks[1], input_dim, H1)
    w2, b2 = linear(ks[2], ks[3], H1, H2)
    w3, b3 = linear(ks[4], ks[5], input_dim and H2, input_dim)  # fan_in=H2
    return {"w1": w1, "b1": b1, "w2": w2, "b2": b2, "w3": w3, "b3": b3}


def prepare_params(params):
    """One-time (per model) prep: pad feature dim to a lane multiple and cast the two big
    hidden-layer weight matrices to bf16.  Keeps the per-call path to a cheap x pad/slice.
    Padded w1 rows are zero (no effect on h1); padded b3 lanes are -1e30 so their softmax
    probability underflows to exactly 0; the output is sliced back to D."""
    w1, b1 = params["w1"], params["b1"]
    w2, b2 = params["w2"], params["b2"]
    w3, b3 = params["w3"], params["b3"]
    D = w1.shape[0]
    Dp = _round_up(D, 128)
    if Dp != D:
        w1 = jnp.pad(w1, ((0, Dp - D), (0, 0)))
        w3 = jnp.pad(w3, ((0, 0), (0, Dp - D)))
        b3 = jnp.pad(b3, ((0, 0), (0, Dp - D)), constant_values=-1e30)
    return {
        "w1": w1.astype(jnp.bfloat16),
        "b1": b1.astype(jnp.float32),
        "w2": w2.astype(jnp.bfloat16),
        "b2": b2.astype(jnp.float32),
        "w3": w3.astype(jnp.float32),
        "b3": b3.astype(jnp.float32),
    }


def reference_f32(x, p):
    """Literal PyTorch-spec forward in f32."""
    h1 = jnp.maximum(x @ p["w1"] + p["b1"], 0.0)
    h2 = jnp.maximum(h1 @ p["w2"] + p["b2"], 0.0)
    logits = h2 @ p["w3"] + p["b3"] + 1e-15
    return jax.nn.softmax(logits, axis=-1)


def reference_mixed(x, p):
    """Same mixed precision as the kernel: bf16 MXU operands for layers 1-2, f32 layer 3."""
    bf = jnp.bfloat16
    h1 = jnp.maximum(jnp.dot(x.astype(bf), p["w1"].astype(bf),
                             preferred_element_type=jnp.float32) + p["b1"], 0.0)
    h2 = jnp.maximum(jnp.dot(h1.astype(bf), p["w2"].astype(bf),
                             preferred_element_type=jnp.float32) + p["b2"], 0.0)
    logits = jnp.dot(h2, p["w3"], preferred_element_type=jnp.float32) + p["b3"]
    return jax.nn.softmax(logits, axis=-1)


if __name__ == "__main__":
    key = jax.random.PRNGKey(0)
    k_x, k_p, k_x2, k_p2 = jax.random.split(key, 4)

    # Config 1: nominal small shape (D a lane multiple, B a sublane multiple).
    batch, input_dim = 16, 128
    x = jax.random.normal(k_x, (batch, input_dim), dtype=jnp.float32)
    params = init_params(k_p, input_dim)
    prep = prepare_params(params)

    out = jax.block_until_ready(distribution_mapper(x, prep))
    assert out.shape == (batch, input_dim)
    # Exact-math check (same mixed precision as the kernel): tight tolerance.
    assert jnp.allclose(out, reference_mixed(x, params), atol=1e-5, rtol=1e-5), \
        "mismatch vs mixed-precision reference"
    # Against the literal f32 PyTorch spec: modest tolerance covering bf16 layers 1-2.
    assert jnp.allclose(out, reference_f32(x, params), atol=5e-4), \
        "mismatch vs f32 spec reference"
    assert jnp.allclose(jnp.sum(out, axis=-1), 1.0, atol=1e-5)

    # Config 2: B % 8 != 0 and D % 128 != 0 -> exercises feature padding, the -1e30 masked
    # softmax lanes, and a ragged last batch tile (OOB rows are dropped on output).
    batch2, input_dim2 = 50, 100
    x2 = jax.random.normal(k_x2, (batch2, input_dim2), dtype=jnp.float32)
    params2 = init_params(k_p2, input_dim2)
    prep2 = prepare_params(params2)

    out2 = jax.block_until_ready(distribution_mapper(x2, prep2))
    assert out2.shape == (batch2, input_dim2)
    assert jnp.allclose(out2, reference_mixed(x2, params2), atol=1e-5, rtol=1e-5), \
        "mismatch vs mixed-precision reference (padded case)"
    assert jnp.allclose(out2, reference_f32(x2, params2), atol=5e-4), \
        "mismatch vs f32 spec reference (padded case)"
    assert jnp.allclose(jnp.sum(out2, axis=-1), 1.0, atol=1e-5)

    print("KERNEL_OK")
</pallas_src>

<mosaic_0001>
module attributes {stable_mosaic.version = 11 : i64} {
  func.func @_mapper_kernel(%arg0: i32, %arg1: memref<8x128xf32, #tpu.memory_space<vmem>>, %arg2: memref<128x512xbf16, #tpu.memory_space<vmem>>, %arg3: memref<1x512xf32, #tpu.memory_space<vmem>>, %arg4: memref<512x256xbf16, #tpu.memory_space<vmem>>, %arg5: memref<1x256xf32, #tpu.memory_space<vmem>>, %arg6: memref<256x128xf32, #tpu.memory_space<vmem>>, %arg7: memref<1x128xf32, #tpu.memory_space<vmem>>, %arg8: memref<8x128xf32, #tpu.memory_space<vmem>>) attributes {dimension_semantics = [#tpu.dimension_semantics<parallel>], iteration_bounds = array<i64: 2>, scalar_prefetch = 0 : i64, scratch_operands = 0 : i64, tpu.core_type = #tpu.core_type<tc>, window_params = [{transform_indices = @transform_0, window_bounds = array<i64: 8, 128>}, {pipeline_mode = #tpu.pipeline_mode<synchronous>, transform_indices = @transform_1, window_bounds = array<i64: 128, 512>}, {pipeline_mode = #tpu.pipeline_mode<synchronous>, transform_indices = @transform_2, window_bounds = array<i64: 1, 512>}, {pipeline_mode = #tpu.pipeline_mode<synchronous>, transform_indices = @transform_3, window_bounds = array<i64: 512, 256>}, {pipeline_mode = #tpu.pipeline_mode<synchronous>, transform_indices = @transform_4, window_bounds = array<i64: 1, 256>}, {pipeline_mode = #tpu.pipeline_mode<synchronous>, transform_indices = @transform_5, window_bounds = array<i64: 256, 128>}, {pipeline_mode = #tpu.pipeline_mode<synchronous>, transform_indices = @transform_6, window_bounds = array<i64: 1, 128>}, {transform_indices = @transform_7, window_bounds = array<i64: 8, 128>}]} {
    %c0 = arith.constant 0 : index
    %c0_0 = arith.constant 0 : index
    %0 = vector.load %arg1[%c0, %c0_0] : memref<8x128xf32, #tpu.memory_space<vmem>>, vector<8x128xf32>
    %1 = arith.truncf %0 : vector<8x128xf32> to vector<8x128xbf16>
    %c0_1 = arith.constant 0 : index
    %c0_2 = arith.constant 0 : index
    %2 = vector.load %arg2[%c0_1, %c0_2] : memref<128x512xbf16, #tpu.memory_space<vmem>>, vector<128x512xbf16>
    %cst = arith.constant dense<0.000000e+00> : vector<8x512xf32>
    %3 = tpu.matmul %1, %2, %cst {dimension_numbers = #tpu.dot_dimension_numbers<[1], [0], [0], [1], [0, 0, 1, 1], [], []>} : vector<8x128xbf16>, vector<128x512xbf16>, vector<8x512xf32> -> vector<8x512xf32>
    %c0_3 = arith.constant 0 : index
    %c0_4 = arith.constant 0 : index
    %4 = vector.load %arg3[%c0_3, %c0_4] : memref<1x512xf32, #tpu.memory_space<vmem>>, vector<1x512xf32>
    %5 = vector.broadcast %4 : vector<1x512xf32> to vector<8x512xf32>
    %6 = arith.addf %3, %5 : vector<8x512xf32>
    %cst_5 = arith.constant 0.000000e+00 : f32
    %7 = vector.broadcast %cst_5 : f32 to vector<8x512xf32>
    %8 = arith.maximumf %6, %7 : vector<8x512xf32>
    %9 = arith.truncf %8 : vector<8x512xf32> to vector<8x512xbf16>
    %c0_6 = arith.constant 0 : index
    %c0_7 = arith.constant 0 : index
    %10 = vector.load %arg4[%c0_6, %c0_7] : memref<512x256xbf16, #tpu.memory_space<vmem>>, vector<512x256xbf16>
    %cst_8 = arith.constant dense<0.000000e+00> : vector<8x256xf32>
    %11 = tpu.matmul %9, %10, %cst_8 {dimension_numbers = #tpu.dot_dimension_numbers<[1], [0], [0], [1], [0, 0, 1, 1], [], []>} : vector<8x512xbf16>, vector<512x256xbf16>, vector<8x256xf32> -> vector<8x256xf32>
    %c0_9 = arith.constant 0 : index
    %c0_10 = arith.constant 0 : index
    %12 = vector.load %arg5[%c0_9, %c0_10] : memref<1x256xf32, #tpu.memory_space<vmem>>, vector<1x256xf32>
    %13 = vector.broadcast %12 : vector<1x256xf32> to vector<8x256xf32>
    %14 = arith.addf %11, %13 : vector<8x256xf32>
    %cst_11 = arith.constant 0.000000e+00 : f32
    %15 = vector.broadcast %cst_11 : f32 to vector<8x256xf32>
    %16 = arith.maximumf %14, %15 : vector<8x256xf32>
    %c0_12 = arith.constant 0 : index
    %c0_13 = arith.constant 0 : index
    %17 = vector.load %arg6[%c0_12, %c0_13] : memref<256x128xf32, #tpu.memory_space<vmem>>, vector<256x128xf32>
    %cst_14 = arith.constant dense<0.000000e+00> : vector<8x128xf32>
    %18 = tpu.matmul %16, %17, %cst_14 {dimension_numbers = #tpu.dot_dimension_numbers<[1], [0], [0], [1], [0, 0, 1, 1], [], []>} : vector<8x256xf32>, vector<256x128xf32>, vector<8x128xf32> -> vector<8x128xf32>
    %c0_15 = arith.constant 0 : index
    %c0_16 = arith.constant 0 : index
    %19 = vector.load %arg7[%c0_15, %c0_16] : memref<1x128xf32, #tpu.memory_space<vmem>>, vector<1x128xf32>
    %20 = vector.broadcast %19 : vector<1x128xf32> to vector<8x128xf32>
    %21 = arith.addf %18, %20 : vector<8x128xf32>
    %cst_17 = arith.constant dense<0xFF800000> : vector<8xf32>
    %22 = vector.multi_reduction <maximumf>, %21, %cst_17 [1] : vector<8x128xf32> to vector<8xf32>
    %23 = vector.shape_cast %22 : vector<8xf32> to vector<8x1xf32>
    %24 = vector.broadcast %23 : vector<8x1xf32> to vector<8x128xf32>
    %25 = arith.subf %21, %24 : vector<8x128xf32>
    %26 = math.exp %25 : vector<8x128xf32>
    %cst_18 = arith.constant dense<0.000000e+00> : vector<8xf32>
    %27 = vector.multi_reduction <add>, %26, %cst_18 [1] : vector<8x128xf32> to vector<8xf32>
    %28 = vector.shape_cast %27 : vector<8xf32> to vector<8x1xf32>
    %29 = tpu.reciprocal %28 {approx = true} : vector<8x1xf32> -> vector<8x1xf32>
    %30 = arith.mulf %28, %29 : vector<8x1xf32>
    %cst_19 = arith.constant 2.000000e+00 : f32
    %31 = vector.broadcast %cst_19 : f32 to vector<8x1xf32>
    %32 = arith.subf %31, %30 : vector<8x1xf32>
    %33 = arith.mulf %29, %32 : vector<8x1xf32>
    %34 = vector.broadcast %33 : vector<8x1xf32> to vector<8x128xf32>
    %35 = arith.mulf %26, %34 : vector<8x128xf32>
    %c0_20 = arith.constant 0 : index
    %c0_21 = arith.constant 0 : index
    %36 = vector.load %arg8[%c0_20, %c0_21] : memref<8x128xf32, #tpu.memory_space<vmem>>, vector<8x128xf32>
    tpu.vector_store %arg8[%c0_20, %c0_21], %35 {strides = array<i32>} : memref<8x128xf32, #tpu.memory_space<vmem>>, vector<8x128xf32>,
    return
  }
  func.func @transform_0(%arg0: i32) -> (i32, i32) {
    %c0_i32 = arith.constant 0 : i32
    %c0_i32_0 = arith.constant 0 : i32
    return %arg0, %c0_i32 : i32, i32
  }
  func.func @transform_1(%arg0: i32) -> (i32, i32) {
    %c0_i32 = arith.constant 0 : i32
    %c0_i32_0 = arith.constant 0 : i32
    %c0_i32_1 = arith.constant 0 : i32
    return %c0_i32, %c0_i32_0 : i32, i32
  }
  func.func @transform_2(%arg0: i32) -> (i32, i32) {
    %c0_i32 = arith.constant 0 : i32
    %c0_i32_0 = arith.constant 0 : i32
    %c0_i32_1 = arith.constant 0 : i32
    return %c0_i32, %c0_i32_0 : i32, i32
  }
  func.func @transform_3(%arg0: i32) -> (i32, i32) {
    %c0_i32 = arith.constant 0 : i32
    %c0_i32_0 = arith.constant 0 : i32
    %c0_i32_1 = arith.constant 0 : i32
    return %c0_i32, %c0_i32_0 : i32, i32
  }
  func.func @transform_4(%arg0: i32) -> (i32, i32) {
    %c0_i32 = arith.constant 0 : i32
    %c0_i32_0 = arith.constant 0 : i32
    %c0_i32_1 = arith.constant 0 : i32
    return %c0_i32, %c0_i32_0 : i32, i32
  }
  func.func @transform_5(%arg0: i32) -> (i32, i32) {
    %c0_i32 = arith.constant 0 : i32
    %c0_i32_0 = arith.constant 0 : i32
    %c0_i32_1 = arith.constant 0 : i32
    return %c0_i32, %c0_i32_0 : i32, i32
  }
  func.func @transform_6(%arg0: i32) -> (i32, i32) {
    %c0_i32 = arith.constant 0 : i32
    %c0_i32_0 = arith.constant 0 : i32
    %c0_i32_1 = arith.constant 0 : i32
    return %c0_i32, %c0_i32_0 : i32, i32
  }
  func.func @transform_7(%arg0: i32) -> (i32, i32) {
    %c0_i32 = arith.constant 0 : i32
    %c0_i32_0 = arith.constant 0 : i32
    return %arg0, %c0_i32 : i32, i32
  }
}

</mosaic_0001>

<llo_original>
// kernel: distribution_mapper.1
$region0: #{distribution_mapper.1}
  #allocation0 [shape = 'u32[]', space=smem, size = 0x4, offset = 0x4, fixed_abs, tag = 'smem constant byte address 0x4 - core index']
  #allocation1 [shape = 'u32[72,128]{1,0:T(1,128)}', space=vmem, size = 0x9000, scoped, tag = 'internal scratch']
  %s0 = inlined_call_operand.hbm [shape: f32[16,128], index: 0, kind: input, shape index: {}]
  %s1 = inlined_call_operand.hbm [shape: bf16[128,512], index: 1, kind: input, shape index: {}]
  %s2 = inlined_call_operand.hbm [shape: f32[1,512], index: 2, kind: input, shape index: {}]
  %s3 = inlined_call_operand.hbm [shape: bf16[512,256], index: 3, kind: input, shape index: {}]
  %s4 = inlined_call_operand.hbm [shape: f32[1,256], index: 4, kind: input, shape index: {}]
  %s5 = inlined_call_operand.hbm [shape: f32[256,128], index: 5, kind: input, shape index: {}]
  %s6 = inlined_call_operand.vmem [shape: f32[1,128], index: 6, kind: input, shape index: {}]
  %s7 = inlined_call_operand.hbm [shape: f32[16,128], index: 7, kind: output, shape index: {}]
  %s8 = sld [smem:[#allocation0]]
  $region85: #{distribution_mapper.1} parent=0
    _
  %s10 = ssub.s32 1, %s8
  %s11 = scalar_select 0, %s10, %s8
  $region1: #{distribution_mapper.1} parent=0
    #allocation2 [shape = 'u8[8192]{0}', space=vmem, size = 0x2000, scoped, tag = 'input window, operand 0']
    #allocation3 [shape = 's32[2]{0}', space=sflag, size = 0x8, scoped, tag = 'scoped memory for distribution_mapper.1']
    #allocation4 [shape = 's32[2]{0}', space=sflag, size = 0x8, scoped, tag = 'scoped memory for distribution_mapper.1']
    #allocation5 [shape = 'u8[131072]{0}', space=vmem, size = 0x20000, scoped, tag = 'input window, operand 1, single buffered']
    #allocation6 [shape = 's32[1]{0}', space=sflag, size = 0x4, scoped, tag = 'scoped memory for distribution_mapper.1']
    #allocation7 [shape = 'u8[2048]{0}', space=vmem, size = 0x800, scoped, tag = 'input window, operand 2, single buffered']
    #allocation8 [shape = 'u8[262144]{0}', space=vmem, size = 0x40000, scoped, tag = 'input window, operand 3, single buffered']
    #allocation9 [shape = 's32[1]{0}', space=sflag, size = 0x4, scoped, tag = 'scoped memory for distribution_mapper.1']
    #allocation10 [shape = 'u8[1024]{0}', space=vmem, size = 0x400, scoped, tag = 'input window, operand 4, single buffered']
    #allocation11 [shape = 'u8[131072]{0}', space=vmem, size = 0x20000, scoped, tag = 'input window, operand 5, single buffered']
    #allocation12 [shape = 's32[1]{0}', space=sflag, size = 0x4, scoped, tag = 'scoped memory for distribution_mapper.1']
    #allocation13 [shape = 'u8[8192]{0}', space=vmem, size = 0x2000, scoped, tag = 'output window, operand 0']
    %12 = vsyncpa [#allocation3], 0
    %s13 = scalar_lea.sflag [#allocation3], 1
    %14 = vsyncpa %s13, 0
    %15 = vsyncpa [#allocation6], 0
    %16 = vsyncpa [#allocation9], 0
    %17 = vsyncpa [#allocation12], 0
    %18 = vsyncpa [#allocation4], 0
    %s19 = scalar_lea.sflag [#allocation4], 1
    %20 = vsyncpa %s19, 0
    loop: start=0, step=1, limit=4
    $region2: #{distribution_mapper.1} parent=1 // loop_pre_header
      _
    $region3: #{distribution_mapper.1} parent=1 // loop_header
      %s22 = sphi 0, %s26
      %p23 = scmp.ge.s32.totalorder %s22, 4
      %s32 = sphi 0, %s34
      %s35 = sphi 0, %s32
      %s36 = sphi 0, %s35
      %s52 = sphi 0, %s36
      %s56 = sphi 0, %s56
      %s58 = sphi 0, %s56
      %s59 = sphi 0, %s58
      %s73 = sphi 0, %s59
      %s77 = sphi 0, %s77
      %s79 = sphi 0, %s77
      %s80 = sphi 0, %s79
      %s94 = sphi 0, %s80
      %s98 = sphi 0, %s98
      %s100 = sphi 0, %s98
      %s101 = sphi 0, %s100
      %s115 = sphi 0, %s101
      %s119 = sphi 0, %s119
      %s121 = sphi 0, %s119
      %s122 = sphi 0, %s121
      %s136 = sphi 0, %s122
      %s140 = sphi 0, %s140
      %s142 = sphi 0, %s140
      %s143 = sphi 0, %s142
      %s157 = sphi 0, %s143
      %s161 = sphi 0, %s161
      %s163 = sphi 0, %s161
      %s164 = sphi 0, %s163
      %s178 = sphi 0, %s164
      %s184 = sphi 0, %s186
      %s187 = sphi 0, %s184
      %s188 = sphi 0, %s187
      %s204 = sphi 0, %s188
    $region4: #{distribution_mapper.1} parent=1 // loop_header_branch
      %25 = sbr.rel (%p23) target = $region8
    $region5: #{distribution_mapper.1} parent=1 // loop_body
      %s27 = ssub.s32 %s22, 1
      %s28 = ssub.s32 %s22, 2
      %s29 = sadd.s32 %s22, 1
      %s30 = ssub.s32 %s22, %s29
      %p31 = scmp.eq.s32.totalorder %s30, 0
      %s33 = sadd.s32 %s32, 1
      %s34 = scalar_select %p31, %s32, %s33
      %p37 = pneg %p31
      %p38 = scmp.eq.s32.totalorder %s22, 1
      %p39 = por %p37, %p38
      %p40 = scmp.ne.s32.totalorder %s32, %s35
      %p41 = scmp.eq.s32.totalorder %s22, 0
      %p42 = por %p40, %p41
      %p43 = scmp.ne.s32.totalorder %s32, %s35
      %p44 = scmp.eq.s32.totalorder %s27, 1
      %p45 = por %p43, %p44
      %p46 = scmp.ne.s32.totalorder %s35, %s36
      %p47 = scmp.eq.s32.totalorder %s27, 0
      %p48 = por %p46, %p47
      %p49 = scmp.ne.s32.totalorder %s35, %s36
      %p50 = scmp.eq.s32.totalorder %s28, 1
      %p51 = por %p49, %p50
      %p53 = scmp.ne.s32.totalorder %s36, %s52
      %p54 = scmp.eq.s32.totalorder %s28, 0
      %p55 = por %p53, %p54
      %s57 = sadd.s32 %s56, 1
      %p60 = scmp.eq.s32.totalorder %s22, 1
      %p61 = scmp.ne.s32.totalorder %s56, %s58
      %p62 = scmp.eq.s32.totalorder %s22, 0
      %p63 = por %p61, %p62
      %p64 = scmp.ne.s32.totalorder %s56, %s58
      %p65 = scmp.eq.s32.totalorder %s27, 1
      %p66 = por %p64, %p65
      %p67 = scmp.ne.s32.totalorder %s58, %s59
      %p68 = scmp.eq.s32.totalorder %s27, 0
      %p69 = por %p67, %p68
      %p70 = scmp.ne.s32.totalorder %s58, %s59
      %p71 = scmp.eq.s32.totalorder %s28, 1
      %p72 = por %p70, %p71
      %p74 = scmp.ne.s32.totalorder %s59, %s73
      %p75 = scmp.eq.s32.totalorder %s28, 0
      %p76 = por %p74, %p75
      %s78 = sadd.s32 %s77, 1
      %p81 = scmp.eq.s32.totalorder %s22, 1
      %p82 = scmp.ne.s32.totalorder %s77, %s79
      %p83 = scmp.eq.s32.totalorder %s22, 0
      %p84 = por %p82, %p83
      %p85 = scmp.ne.s32.totalorder %s77, %s79
      %p86 = scmp.eq.s32.totalorder %s27, 1
      %p87 = por %p85, %p86
      %p88 = scmp.ne.s32.totalorder %s79, %s80
      %p89 = scmp.eq.s32.totalorder %s27, 0
      %p90 = por %p88, %p89
      %p91 = scmp.ne.s32.totalorder %s79, %s80
      %p92 = scmp.eq.s32.totalorder %s28, 1
      %p93 = por %p91, %p92
      %p95 = scmp.ne.s32.totalorder %s80, %s94
      %p96 = scmp.eq.s32.totalorder %s28, 0
      %p97 = por %p95, %p96
      %s99 = sadd.s32 %s98, 1
      %p102 = scmp.eq.s32.totalorder %s22, 1
      %p103 = scmp.ne.s32.totalorder %s98, %s100
      %p104 = scmp.eq.s32.totalorder %s22, 0
      %p105 = por %p103, %p104
      %p106 = scmp.ne.s32.totalorder %s98, %s100
      %p107 = scmp.eq.s32.totalorder %s27, 1
      %p108 = por %p106, %p107
      %p109 = scmp.ne.s32.totalorder %s100, %s101
      %p110 = scmp.eq.s32.totalorder %s27, 0
      %p111 = por %p109, %p110
      %p112 = scmp.ne.s32.totalorder %s100, %s101
      %p113 = scmp.eq.s32.totalorder %s28, 1
      %p114 = por %p112, %p113
      %p116 = scmp.ne.s32.totalorder %s101, %s115
      %p117 = scmp.eq.s32.totalorder %s28, 0
      %p118 = por %p116, %p117
      %s120 = sadd.s32 %s119, 1
      %p123 = scmp.eq.s32.totalorder %s22, 1
      %p124 = scmp.ne.s32.totalorder %s119, %s121
      %p125 = scmp.eq.s32.totalorder %s22, 0
      %p126 = por %p124, %p125
      %p127 = scmp.ne.s32.totalorder %s119, %s121
      %p128 = scmp.eq.s32.totalorder %s27, 1
      %p129 = por %p127, %p128
      %p130 = scmp.ne.s32.totalorder %s121, %s122
      %p131 = scmp.eq.s32.totalorder %s27, 0
      %p132 = por %p130, %p131
      %p133 = scmp.ne.s32.totalorder %s121, %s122
      %p134 = scmp.eq.s32.totalorder %s28, 1
      %p135 = por %p133, %p134
      %p137 = scmp.ne.s32.totalorder %s122, %s136
      %p138 = scmp.eq.s32.totalorder %s28, 0
      %p139 = por %p137, %p138
      %s141 = sadd.s32 %s140, 1
      %p144 = scmp.eq.s32.totalorder %s22, 1
      %p145 = scmp.ne.s32.totalorder %s140, %s142
      %p146 = scmp.eq.s32.totalorder %s22, 0
      %p147 = por %p145, %p146
      %p148 = scmp.ne.s32.totalorder %s140, %s142
      %p149 = scmp.eq.s32.totalorder %s27, 1
      %p150 = por %p148, %p149
      %p151 = scmp.ne.s32.totalorder %s142, %s143
      %p152 = scmp.eq.s32.totalorder %s27, 0
      %p153 = por %p151, %p152
      %p154 = scmp.ne.s32.totalorder %s142, %s143
      %p155 = scmp.eq.s32.totalorder %s28, 1
      %p156 = por %p154, %p155
      %p158 = scmp.ne.s32.totalorder %s143, %s157
      %p159 = scmp.eq.s32.totalorder %s28, 0
      %p160 = por %p158, %p159
      %s162 = sadd.s32 %s161, 1
      %p165 = scmp.eq.s32.totalorder %s22, 1
      %p166 = scmp.ne.s32.totalorder %s161, %s163
      %p167 = scmp.eq.s32.totalorder %s22, 0
      %p168 = por %p166, %p167
      %p169 = scmp.ne.s32.totalorder %s161, %s163
      %p170 = scmp.eq.s32.totalorder %s27, 1
      %p171 = por %p169, %p170
      %p172 = scmp.ne.s32.totalorder %s163, %s164
      %p173 = scmp.eq.s32.totalorder %s27, 0
      %p174 = por %p172, %p173
      %p175 = scmp.ne.s32.totalorder %s163, %s164
      %p176 = scmp.eq.s32.totalorder %s28, 1
      %p177 = por %p175, %p176
      %p179 = scmp.ne.s32.totalorder %s164, %s178
      %p180 = scmp.eq.s32.totalorder %s28, 0
      %p181 = por %p179, %p180
      %s182 = ssub.s32 %s22, %s29
      %p183 = scmp.eq.s32.totalorder %s182, 0
      %s185 = sadd.s32 %s184, 1
      %s186 = scalar_select %p183, %s184, %s185
      %p189 = pneg %p183
      %p190 = scmp.eq.s32.totalorder %s22, 1
      %p191 = por %p189, %p190
      %p192 = scmp.ne.s32.totalorder %s184, %s187
      %p193 = scmp.eq.s32.totalorder %s22, 0
      %p194 = por %p192, %p193
      %p195 = scmp.ne.s32.totalorder %s184, %s187
      %p196 = scmp.eq.s32.totalorder %s27, 1
      %p197 = por %p195, %p196
      %p198 = scmp.ne.s32.totalorder %s187, %s188
      %p199 = scmp.eq.s32.totalorder %s27, 0
      %p200 = por %p198, %p199
      %p201 = scmp.ne.s32.totalorder %s187, %s188
      %p202 = scmp.eq.s32.totalorder %s28, 1
      %p203 = por %p201, %p202
      %p205 = scmp.ne.s32.totalorder %s188, %s204
      %p206 = scmp.eq.s32.totalorder %s28, 0
      %p207 = por %p205, %p206
      %p208 = scmp.le.s32.totalorder 1, %s22
      %p209 = scmp.lt.s32.totalorder %s22, 3
      %p210 = pnand %p208, %p209
      %p211 = pneg %p210
      // Predicated region
      $region9: #{distribution_mapper.1} parent=5 // pred_check
        _
      $region10: #{distribution_mapper.1} parent=5 // pred_check_branch
        %213 = sbr.rel (%p210) target = $region12
      $region11: #{distribution_mapper.1} parent=5 // pred_region
        %s214 = ssub.s32 %s22, 1
        // Predicated region
        $region13: #{distribution_mapper.1} parent=11 // pred_check
          %p215 = pneg %p69
        $region14: #{distribution_mapper.1} parent=11 // pred_check_branch
          %217 = sbr.rel (%p215) target = $region16
        $region15: #{distribution_mapper.1} parent=11 // pred_region
          %219 = vsyncadd [#allocation6], 0
          %s220 = sshll.u32 %s1, 4
          %s221 = int_to_ptr.hbm [resolvable:$true] %s220
          %s222 = sshll.u32 [#allocation5], 4
          %s223 = int_to_ptr.vmem [resolvable:$true] %s222
          %228 = dma.hbm_to_vmem [thread:$0]  %s221, 4096, %s223, [#allocation6], 256, 256, 16
        $region16: #{distribution_mapper.1} parent=11 // pred_fallthru
          _
        // Predicated region
        $region17: #{distribution_mapper.1} parent=11 // pred_check
          %p229 = pneg %p90
        $region18: #{distribution_mapper.1} parent=11 // pred_check_branch
          %231 = sbr.rel (%p229) target = $region20
        $region19: #{distribution_mapper.1} parent=11 // pred_region
          %233 = vsyncadd [#allocation6], 0
          %s235 = sshll.u32 %s2, 4
          %s236 = int_to_ptr.hbm [resolvable:$true] %s235
          %s237 = sshll.u32 [#allocation7], 4
          %s238 = int_to_ptr.vmem [resolvable:$true] %s237
          %240 = dma.hbm_to_vmem [thread:$0]  %s236, 64, %s238, [#allocation6]
        $region20: #{distribution_mapper.1} parent=11 // pred_fallthru
          _
        // Predicated region
        $region21: #{distribution_mapper.1} parent=11 // pred_check
          %p241 = pneg %p111
        $region22: #{distribution_mapper.1} parent=11 // pred_check_branch
          %243 = sbr.rel (%p241) target = $region24
        $region23: #{distribution_mapper.1} parent=11 // pred_region
          %245 = vsyncadd [#allocation9], 0
          %s246 = sshll.u32 %s3, 4
          %s247 = int_to_ptr.hbm [resolvable:$true] %s246
          %s248 = sshll.u32 [#allocation8], 4
          %s249 = int_to_ptr.vmem [resolvable:$true] %s248
          %254 = dma.hbm_to_vmem [thread:$0]  %s247, 8192, %s249, [#allocation9], 128, 128, 8
        $region24: #{distribution_mapper.1} parent=11 // pred_fallthru
          _
        // Predicated region
        $region25: #{distribution_mapper.1} parent=11 // pred_check
          %p255 = pneg %p132
        $region26: #{distribution_mapper.1} parent=11 // pred_check_branch
          %257 = sbr.rel (%p255) target = $region28
        $region27: #{distribution_mapper.1} parent=11 // pred_region
          %259 = vsyncadd [#allocation9], 0
          %s261 = sshll.u32 %s4, 4
          %s262 = int_to_ptr.hbm [resolvable:$true] %s261
          %s263 = sshll.u32 [#allocation10], 4
          %s264 = int_to_ptr.vmem [resolvable:$true] %s263
          %266 = dma.hbm_to_vmem [thread:$0]  %s262, 32, %s264, [#allocation9]
        $region28: #{distribution_mapper.1} parent=11 // pred_fallthru
          _
        // Predicated region
        $region29: #{distribution_mapper.1} parent=11 // pred_check
          %p267 = pneg %p153
        $region30: #{distribution_mapper.1} parent=11 // pred_check_branch
          %269 = sbr.rel (%p267) target = $region32
        $region31: #{distribution_mapper.1} parent=11 // pred_region
          %271 = vsyncadd [#allocation12], 0
          %s272 = sshll.u32 %s5, 4
          %s273 = int_to_ptr.hbm [resolvable:$true] %s272
          %s274 = sshll.u32 [#allocation11], 4
          %s275 = int_to_ptr.vmem [resolvable:$true] %s274
          %280 = dma.hbm_to_vmem [thread:$0]  %s273, 4096, %s275, [#allocation12], 128, 128, 8
        $region32: #{distribution_mapper.1} parent=11 // pred_fallthru
          _
        // Predicated region
        $region33: #{distribution_mapper.1} parent=11 // pred_check
          %p281 = pneg %p174
        $region34: #{distribution_mapper.1} parent=11 // pred_check_branch
          %283 = sbr.rel (%p281) target = $region36
        $region35: #{distribution_mapper.1} parent=11 // pred_region
          _
        $region36: #{distribution_mapper.1} parent=11 // pred_fallthru
          _
      $region12: #{distribution_mapper.1} parent=5 // pred_fallthru
        _
      %p284 = scmp.lt.s32.totalorder %s22, 2
      // Predicated region
      $region37: #{distribution_mapper.1} parent=5 // pred_check
        %p285 = pneg %p284
      $region38: #{distribution_mapper.1} parent=5 // pred_check_branch
        %287 = sbr.rel (%p285) target = $region40
      $region39: #{distribution_mapper.1} parent=5 // pred_region
        // Predicated region
        $region41: #{distribution_mapper.1} parent=39 // pred_check
          %p288 = pneg %p42
        $region42: #{distribution_mapper.1} parent=39 // pred_check_branch
          %290 = sbr.rel (%p288) target = $region44
        $region43: #{distribution_mapper.1} parent=39 // pred_region
          %s291 = sand.u32 %s32, 1
          %s292 = scalar_lea.sflag [#allocation3], %s291
          %s293 = sand.u32 %s32, 1
          %s294 = smul.addr %s293, 8
          %s295 = scalar_lea.vmem [#allocation2], %s294
          %297 = vsyncadd %s292, 0
          %s298 = smul.addr %s22, 8
          %s299 = scalar_lea.hbm %s0, %s298
          %s301 = sshll.u32 %s299, 4
          %s302 = int_to_ptr.hbm [resolvable:$true] %s301
          %s303 = sshll.u32 %s295, 4
          %s304 = int_to_ptr.vmem [resolvable:$true] %s303
          %306 = dma.hbm_to_vmem [thread:$0]  %s302, 128, %s304, %s292
        $region44: #{distribution_mapper.1} parent=39 // pred_fallthru
          _
      $region40: #{distribution_mapper.1} parent=5 // pred_fallthru
        _
      %p307 = scmp.le.s32.totalorder 1, %s22
      %p308 = scmp.lt.s32.totalorder %s22, 3
      %p309 = pnand %p307, %p308
      %p310 = pneg %p309
      // Predicated region
      $region45: #{distribution_mapper.1} parent=5 // pred_check
        _
      $region46: #{distribution_mapper.1} parent=5 // pred_check_branch
        %312 = sbr.rel (%p309) target = $region48
      $region47: #{distribution_mapper.1} parent=5 // pred_region
        %s313 = ssub.s32 %s22, 1
        %s314 = sand.u32 %s35, 1
        %s315 = scalar_lea.sflag [#allocation3], %s314
        %s316 = sand.u32 %s35, 1
        %s317 = smul.addr %s316, 8
        %s318 = scalar_lea.vmem [#allocation2], %s317
        // Predicated region
        $region49: #{distribution_mapper.1} parent=47 // pred_check
          %p319 = pneg %p48
        $region50: #{distribution_mapper.1} parent=47 // pred_check_branch
          %321 = sbr.rel (%p319) target = $region52
        $region51: #{distribution_mapper.1} parent=47 // pred_region
          %323 = dma.done %s315, 128
        $region52: #{distribution_mapper.1} parent=47 // pred_fallthru
          _
        // Predicated region
        $region53: #{distribution_mapper.1} parent=47 // pred_check
          %p324 = pneg %p69
        $region54: #{distribution_mapper.1} parent=47 // pred_check_branch
          %326 = sbr.rel (%p324) target = $region56
        $region55: #{distribution_mapper.1} parent=47 // pred_region
          %328 = dma.done [#allocation6], 4096
        $region56: #{distribution_mapper.1} parent=47 // pred_fallthru
          _
        // Predicated region
        $region57: #{distribution_mapper.1} parent=47 // pred_check
          %p329 = pneg %p90
        $region58: #{distribution_mapper.1} parent=47 // pred_check_branch
          %331 = sbr.rel (%p329) target = $region60
        $region59: #{distribution_mapper.1} parent=47 // pred_region
          %333 = dma.done [#allocation6], 64
        $region60: #{distribution_mapper.1} parent=47 // pred_fallthru
          _
        // Predicated region
        $region61: #{distribution_mapper.1} parent=47 // pred_check
          %p334 = pneg %p111
        $region62: #{distribution_mapper.1} parent=47 // pred_check_branch
          %336 = sbr.rel (%p334) target = $region64
        $region63: #{distribution_mapper.1} parent=47 // pred_region
          %338 = dma.done [#allocation9], 8192
        $region64: #{distribution_mapper.1} parent=47 // pred_fallthru
          _
        // Predicated region
        $region65: #{distribution_mapper.1} parent=47 // pred_check
          %p339 = pneg %p132
        $region66: #{distribution_mapper.1} parent=47 // pred_check_branch
          %341 = sbr.rel (%p339) target = $region68
        $region67: #{distribution_mapper.1} parent=47 // pred_region
          %343 = dma.done [#allocation9], 32
        $region68: #{distribution_mapper.1} parent=47 // pred_fallthru
          _
        // Predicated region
        $region69: #{distribution_mapper.1} parent=47 // pred_check
          %p344 = pneg %p153
        $region70: #{distribution_mapper.1} parent=47 // pred_check_branch
          %346 = sbr.rel (%p344) target = $region72
        $region71: #{distribution_mapper.1} parent=47 // pred_region
          %348 = dma.done [#allocation12], 4096
        $region72: #{distribution_mapper.1} parent=47 // pred_fallthru
          _
        %s349 = sand.u32 %s35, 1
        %s350 = scalar_lea.sflag [#allocation3], %s349
        %s351 = sand.u32 %s35, 1
        %s352 = smul.addr %s351, 8
        %s353 = scalar_lea.vmem [#allocation2], %s352
        %p354 = pneg %p48
        %p355 = pneg %p45
        %p356 = pneg %p69
        %p357 = pneg %p66
        %p358 = pneg %p90
        %p359 = pneg %p87
        %p360 = pneg %p111
        %p361 = pneg %p108
        %p362 = pneg %p132
        %p363 = pneg %p129
        %p364 = pneg %p153
        %p365 = pneg %p150
        %p366 = pneg %p174
        %p367 = pneg %p171
        %p368 = pneg %p200
        %p369 = pneg %p197
        %s370 = sand.u32 %s187, 1
        %s371 = scalar_lea.sflag [#allocation4], %s370
        %s372 = sand.u32 %s187, 1
        %s373 = smul.addr %s372, 8
        %s374 = scalar_lea.vmem [#allocation13], %s373
        %v375 = vld [vmem:[%s318] sm:$0xff]
        %v376 = vpack.c.bf16 %v375, %v375
        %v377 = vld [vmem:[#allocation5] sm:$0xff]
        %v378 = vld [vmem:[#allocation5 + $0x8] sm:$0xff]
        %v379 = vld [vmem:[#allocation5 + $0x10] sm:$0xff]
        %v380 = vld [vmem:[#allocation5 + $0x18] sm:$0xff]
        %v381 = vld [vmem:[#allocation5 + $0x20] sm:$0xff]
        %v382 = vld [vmem:[#allocation5 + $0x28] sm:$0xff]
        %v383 = vld [vmem:[#allocation5 + $0x30] sm:$0xff]
        %v384 = vld [vmem:[#allocation5 + $0x38] sm:$0xff]
        %v385 = vld [vmem:[#allocation5 + $0x40] sm:$0xff]
        %v386 = vld [vmem:[#allocation5 + $0x48] sm:$0xff]
        %v387 = vld [vmem:[#allocation5 + $0x50] sm:$0xff]
        %v388 = vld [vmem:[#allocation5 + $0x58] sm:$0xff]
        %v389 = vld [vmem:[#allocation5 + $0x60] sm:$0xff]
        %v390 = vld [vmem:[#allocation5 + $0x68] sm:$0xff]
        %v391 = vld [vmem:[#allocation5 + $0x70] sm:$0xff]
        %v392 = vld [vmem:[#allocation5 + $0x78] sm:$0xff]
        %v393 = vld [vmem:[#allocation5 + $0x80] sm:$0xff]
        %v394 = vld [vmem:[#allocation5 + $0x88] sm:$0xff]
        %v395 = vld [vmem:[#allocation5 + $0x90] sm:$0xff]
        %v396 = vld [vmem:[#allocation5 + $0x98] sm:$0xff]
        %v397 = vld [vmem:[#allocation5 + $0xa0] sm:$0xff]
        %v398 = vld [vmem:[#allocation5 + $0xa8] sm:$0xff]
        %v399 = vld [vmem:[#allocation5 + $0xb0] sm:$0xff]
        %v400 = vld [vmem:[#allocation5 + $0xb8] sm:$0xff]
        %v401 = vld [vmem:[#allocation5 + $0xc0] sm:$0xff]
        %v402 = vld [vmem:[#allocation5 + $0xc8] sm:$0xff]
        %v403 = vld [vmem:[#allocation5 + $0xd0] sm:$0xff]
        %v404 = vld [vmem:[#allocation5 + $0xd8] sm:$0xff]
        %v405 = vld [vmem:[#allocation5 + $0xe0] sm:$0xff]
        %v406 = vld [vmem:[#allocation5 + $0xe8] sm:$0xff]
        %v407 = vld [vmem:[#allocation5 + $0xf0] sm:$0xff]
        %v408 = vld [vmem:[#allocation5 + $0xf8] sm:$0xff]
        %v409 = vld [vmem:[#allocation7] sm:$0xf]
        %v411 = vperm.slane %v409, 0
        %v412 = vperm.slane %v409, 1
        %v413 = vperm.slane %v409, 2
        %v414 = vperm.slane %v409, 3
        %v451 = vunpack.c.l.b16 %v377
        %v452 = vunpack.c.h.b16 %v377
        %v453 = vunpack.c.l.b16 %v378
        %v454 = vunpack.c.h.b16 %v378
        %v455 = vunpack.c.l.b16 %v379
        %v456 = vunpack.c.h.b16 %v379
        %v457 = vunpack.c.l.b16 %v380
        %v458 = vunpack.c.h.b16 %v380
        %v459 = vunpack.c.l.b16 %v381
        %v460 = vunpack.c.h.b16 %v381
        %v461 = vunpack.c.l.b16 %v382
        %v462 = vunpack.c.h.b16 %v382
        %v463 = vunpack.c.l.b16 %v383
        %v464 = vunpack.c.h.b16 %v383
        %v465 = vunpack.c.l.b16 %v384
        %v466 = vunpack.c.h.b16 %v384
        %v467 = vunpack.c.l.b16 %v385
        %v468 = vunpack.c.h.b16 %v385
        %v469 = vunpack.c.l.b16 %v386
        %v470 = vunpack.c.h.b16 %v386
        %v471 = vunpack.c.l.b16 %v387
        %v472 = vunpack.c.h.b16 %v387
        %v473 = vunpack.c.l.b16 %v388
        %v474 = vunpack.c.h.b16 %v388
        %v475 = vunpack.c.l.b16 %v389
        %v476 = vunpack.c.h.b16 %v389
        %v477 = vunpack.c.l.b16 %v390
        %v478 = vunpack.c.h.b16 %v390
        %v479 = vunpack.c.l.b16 %v391
        %v480 = vunpack.c.h.b16 %v391
        %v481 = vunpack.c.l.b16 %v392
        %v482 = vunpack.c.h.b16 %v392
        %v483 = vunpack.c.l.b16 %v393
        %v484 = vunpack.c.h.b16 %v393
        %v485 = vunpack.c.l.b16 %v394
        %v486 = vunpack.c.h.b16 %v394
        %v487 = vunpack.c.l.b16 %v395
        %v488 = vunpack.c.h.b16 %v395
        %v489 = vunpack.c.l.b16 %v396
        %v490 = vunpack.c.h.b16 %v396
        %v491 = vunpack.c.l.b16 %v397
        %v492 = vunpack.c.h.b16 %v397
        %v493 = vunpack.c.l.b16 %v398
        %v494 = vunpack.c.h.b16 %v398
        %v495 = vunpack.c.l.b16 %v399
        %v496 = vunpack.c.h.b16 %v399
        %v497 = vunpack.c.l.b16 %v400
        %v498 = vunpack.c.h.b16 %v400
        %v499 = vunpack.c.l.b16 %v401
        %v500 = vunpack.c.h.b16 %v401
        %v501 = vunpack.c.l.b16 %v402
        %v502 = vunpack.c.h.b16 %v402
        %v503 = vunpack.c.l.b16 %v403
        %v504 = vunpack.c.h.b16 %v403
        %v505 = vunpack.c.l.b16 %v404
        %v506 = vunpack.c.h.b16 %v404
        %v507 = vunpack.c.l.b16 %v405
        %v508 = vunpack.c.h.b16 %v405
        %v509 = vunpack.c.l.b16 %v406
        %v510 = vunpack.c.h.b16 %v406
        %v511 = vunpack.c.l.b16 %v407
        %v512 = vunpack.c.h.b16 %v407
        %v513 = vunpack.c.l.b16 %v408
        %v514 = vunpack.c.h.b16 %v408
        %v515 = vpack.c.b16 %v455, %v451
        %v516 = vpack.c.b16 %v456, %v452
        %v517 = vpack.c.b16 %v457, %v453
        %v518 = vpack.c.b16 %v458, %v454
        %v519 = vpack.c.b16 %v463, %v459
        %v520 = vpack.c.b16 %v464, %v460
        %v521 = vpack.c.b16 %v465, %v461
        %v522 = vpack.c.b16 %v466, %v462
        %v523 = vpack.c.b16 %v471, %v467
        %v524 = vpack.c.b16 %v472, %v468
        %v525 = vpack.c.b16 %v473, %v469
        %v526 = vpack.c.b16 %v474, %v470
        %v527 = vpack.c.b16 %v479, %v475
        %v528 = vpack.c.b16 %v480, %v476
        %v529 = vpack.c.b16 %v481, %v477
        %v530 = vpack.c.b16 %v482, %v478
        %v531 = vpack.c.b16 %v487, %v483
        %v532 = vpack.c.b16 %v488, %v484
        %v533 = vpack.c.b16 %v489, %v485
        %v534 = vpack.c.b16 %v490, %v486
        %v535 = vpack.c.b16 %v495, %v491
        %v536 = vpack.c.b16 %v496, %v492
        %v537 = vpack.c.b16 %v497, %v493
        %v538 = vpack.c.b16 %v498, %v494
        %v539 = vpack.c.b16 %v503, %v499
        %v540 = vpack.c.b16 %v504, %v500
        %v541 = vpack.c.b16 %v505, %v501
        %v542 = vpack.c.b16 %v506, %v502
        %v543 = vpack.c.b16 %v511, %v507
        %v544 = vpack.c.b16 %v512, %v508
        %v545 = vpack.c.b16 %v513, %v509
        %v546 = vpack.c.b16 %v514, %v510
        %579 = vmatpush.bf16.msra.mxu0 %v543
        %580 = vmatpush.bf16.msra.mxu0 %v539
        %581 = vmatpush.bf16.msra.mxu0 %v535
        %582 = vmatpush.bf16.msra.mxu0 %v531
        %583 = vmatpush.bf16.msra.mxu0 %v527
        %584 = vmatpush.bf16.msra.mxu0 %v523
        %585 = vmatpush.bf16.msra.mxu0 %v519
        %586 = vmatpush.bf16.msra.mxu0 %v515
        %587 = vmatmul.bf16.gmra.mxu0 %v376
        %v588 = vpop.f32.mrf.mxu0
        %v589 = vadd.f32 %v411, %v588
        %v590 = vpop.f32.mrf.mxu0
        %591 = vdwg.mxu0
        %592 = vmatpush.bf16.msra.mxu0 %v544
        %593 = vmatpush.bf16.msra.mxu0 %v540
        %594 = vmatpush.bf16.msra.mxu0 %v536
        %595 = vmatpush.bf16.msra.mxu0 %v532
        %596 = vmatpush.bf16.msra.mxu0 %v528
        %597 = vmatpush.bf16.msra.mxu0 %v524
        %598 = vmatpush.bf16.msra.mxu0 %v520
        %599 = vmatpush.bf16.msra.mxu0 %v516
        %600 = vmatmul.bf16.gmra.mxu0 %v376
        %v601 = vpop.f32.mrf.mxu0
        %v602 = vadd.f32 %v412, %v601
        %v603 = vpop.f32.mrf.mxu0
        %604 = vdwg.mxu0
        %605 = vmatpush.bf16.msra.mxu0 %v545
        %606 = vmatpush.bf16.msra.mxu0 %v541
        %607 = vmatpush.bf16.msra.mxu0 %v537
        %608 = vmatpush.bf16.msra.mxu0 %v533
        %609 = vmatpush.bf16.msra.mxu0 %v529
        %610 = vmatpush.bf16.msra.mxu0 %v525
        %611 = vmatpush.bf16.msra.mxu0 %v521
        %612 = vmatpush.bf16.msra.mxu0 %v517
        %613 = vmatmul.bf16.gmra.mxu0 %v376
        %v614 = vpop.f32.mrf.mxu0
        %v615 = vadd.f32 %v413, %v614
        %v616 = vpop.f32.mrf.mxu0
        %617 = vdwg.mxu0
        %618 = vmatpush.bf16.msra.mxu0 %v546
        %619 = vmatpush.bf16.msra.mxu0 %v542
        %620 = vmatpush.bf16.msra.mxu0 %v538
        %621 = vmatpush.bf16.msra.mxu0 %v534
        %622 = vmatpush.bf16.msra.mxu0 %v530
        %623 = vmatpush.bf16.msra.mxu0 %v526
        %624 = vmatpush.bf16.msra.mxu0 %v522
        %625 = vmatpush.bf16.msra.mxu0 %v518
        %626 = vmatmul.bf16.gmra.mxu0 %v376
        %v627 = vpop.f32.mrf.mxu0
        %v628 = vadd.f32 %v414, %v627
        %v629 = vpop.f32.mrf.mxu0
        %630 = vdwg.mxu0
        %v631 = vmax.f32 %v589, 0.0
        %v632 = vmax.f32 %v602, 0.0
        %v633 = vmax.f32 %v615, 0.0
        %v634 = vmax.f32 %v628, 0.0
        %v635 = vpack.c.bf16 %v631, %v631
        %v636 = vpack.c.bf16 %v632, %v632
        %v637 = vpack.c.bf16 %v633, %v633
        %v638 = vpack.c.bf16 %v634, %v634
        %v639 = vld [vmem:[#allocation8] sm:$0xff]
        %v640 = vld [vmem:[#allocation8 + $0x8] sm:$0xff]
        %v641 = vld [vmem:[#allocation8 + $0x10] sm:$0xff]
        %v642 = vld [vmem:[#allocation8 + $0x18] sm:$0xff]
        %v643 = vld [vmem:[#allocation8 + $0x20] sm:$0xff]
        %v644 = vld [vmem:[#allocation8 + $0x28] sm:$0xff]
        %v645 = vld [vmem:[#allocation8 + $0x30] sm:$0xff]
        %v646 = vld [vmem:[#allocation8 + $0x38] sm:$0xff]
        %v647 = vld [vmem:[#allocation8 + $0x40] sm:$0xff]
        %v648 = vld [vmem:[#allocation8 + $0x48] sm:$0xff]
        %v649 = vld [vmem:[#allocation8 + $0x50] sm:$0xff]
        %v650 = vld [vmem:[#allocation8 + $0x58] sm:$0xff]
        %v651 = vld [vmem:[#allocation8 + $0x60] sm:$0xff]
        %v652 = vld [vmem:[#allocation8 + $0x68] sm:$0xff]
        %v653 = vld [vmem:[#allocation8 + $0x70] sm:$0xff]
        %v654 = vld [vmem:[#allocation8 + $0x78] sm:$0xff]
        %v655 = vld [vmem:[#allocation8 + $0x80] sm:$0xff]
        %v656 = vld [vmem:[#allocation8 + $0x88] sm:$0xff]
        %v657 = vld [vmem:[#allocation8 + $0x90] sm:$0xff]
        %v658 = vld [vmem:[#allocation8 + $0x98] sm:$0xff]
        %v659 = vld [vmem:[#allocation8 + $0xa0] sm:$0xff]
        %v660 = vld [vmem:[#allocation8 + $0xa8] sm:$0xff]
        %v661 = vld [vmem:[#allocation8 + $0xb0] sm:$0xff]
        %v662 = vld [vmem:[#allocation8 + $0xb8] sm:$0xff]
        %v663 = vld [vmem:[#allocation8 + $0xc0] sm:$0xff]
        %v664 = vld [vmem:[#allocation8 + $0xc8] sm:$0xff]
        %v665 = vld [vmem:[#allocation8 + $0xd0] sm:$0xff]
        %v666 = vld [vmem:[#allocation8 + $0xd8] sm:$0xff]
        %v667 = vld [vmem:[#allocation8 + $0xe0] sm:$0xff]
        %v668 = vld [vmem:[#allocation8 + $0xe8] sm:$0xff]
        %v669 = vld [vmem:[#allocation8 + $0xf0] sm:$0xff]
        %v670 = vld [vmem:[#allocation8 + $0xf8] sm:$0xff]
        %v671 = vld [vmem:[#allocation8 + $0x100] sm:$0xff]
        %v672 = vld [vmem:[#allocation8 + $0x108] sm:$0xff]
        %v673 = vld [vmem:[#allocation8 + $0x110] sm:$0xff]
        %v674 = vld [vmem:[#allocation8 + $0x118] sm:$0xff]
        %v675 = vld [vmem:[#allocation8 + $0x120] sm:$0xff]
        %v676 = vld [vmem:[#allocation8 + $0x128] sm:$0xff]
        %v677 = vld [vmem:[#allocation8 + $0x130] sm:$0xff]
        %v678 = vld [vmem:[#allocation8 + $0x138] sm:$0xff]
        %v679 = vld [vmem:[#allocation8 + $0x140] sm:$0xff]
        %v680 = vld [vmem:[#allocation8 + $0x148] sm:$0xff]
        %v681 = vld [vmem:[#allocation8 + $0x150] sm:$0xff]
        %v682 = vld [vmem:[#allocation8 + $0x158] sm:$0xff]
        %v683 = vld [vmem:[#allocation8 + $0x160] sm:$0xff]
        %v684 = vld [vmem:[#allocation8 + $0x168] sm:$0xff]
        %v685 = vld [vmem:[#allocation8 + $0x170] sm:$0xff]
        %v686 = vld [vmem:[#allocation8 + $0x178] sm:$0xff]
        %v687 = vld [vmem:[#allocation8 + $0x180] sm:$0xff]
        %v688 = vld [vmem:[#allocation8 + $0x188] sm:$0xff]
        %v689 = vld [vmem:[#allocation8 + $0x190] sm:$0xff]
        %v690 = vld [vmem:[#allocation8 + $0x198] sm:$0xff]
        %v691 = vld [vmem:[#allocation8 + $0x1a0] sm:$0xff]
        %v692 = vld [vmem:[#allocation8 + $0x1a8] sm:$0xff]
        %v693 = vld [vmem:[#allocation8 + $0x1b0] sm:$0xff]
        %v694 = vld [vmem:[#allocation8 + $0x1b8] sm:$0xff]
        %v695 = vld [vmem:[#allocation8 + $0x1c0] sm:$0xff]
        %v696 = vld [vmem:[#allocation8 + $0x1c8] sm:$0xff]
        %v697 = vld [vmem:[#allocation8 + $0x1d0] sm:$0xff]
        %v698 = vld [vmem:[#allocation8 + $0x1d8] sm:$0xff]
        %v699 = vld [vmem:[#allocation8 + $0x1e0] sm:$0xff]
        %v700 = vld [vmem:[#allocation8 + $0x1e8] sm:$0xff]
        %v701 = vld [vmem:[#allocation8 + $0x1f0] sm:$0xff]
        %v702 = vld [vmem:[#allocation8 + $0x1f8] sm:$0xff]
        %v703 = vld [vmem:[#allocation10] sm:$0x3]
        %v705 = vperm.slane %v703, 0
        %v706 = vperm.slane %v703, 1
        %v773 = vunpack.c.l.b16 %v639
        %v774 = vunpack.c.h.b16 %v639
        %v775 = vunpack.c.l.b16 %v640
        %v776 = vunpack.c.h.b16 %v640
        %v777 = vunpack.c.l.b16 %v641
        %v778 = vunpack.c.h.b16 %v641
        %v779 = vunpack.c.l.b16 %v642
        %v780 = vunpack.c.h.b16 %v642
        %v781 = vunpack.c.l.b16 %v643
        %v782 = vunpack.c.h.b16 %v643
        %v783 = vunpack.c.l.b16 %v644
        %v784 = vunpack.c.h.b16 %v644
        %v785 = vunpack.c.l.b16 %v645
        %v786 = vunpack.c.h.b16 %v645
        %v787 = vunpack.c.l.b16 %v646
        %v788 = vunpack.c.h.b16 %v646
        %v789 = vunpack.c.l.b16 %v647
        %v790 = vunpack.c.h.b16 %v647
        %v791 = vunpack.c.l.b16 %v648
        %v792 = vunpack.c.h.b16 %v648
        %v793 = vunpack.c.l.b16 %v649
        %v794 = vunpack.c.h.b16 %v649
        %v795 = vunpack.c.l.b16 %v650
        %v796 = vunpack.c.h.b16 %v650
        %v797 = vunpack.c.l.b16 %v651
        %v798 = vunpack.c.h.b16 %v651
        %v799 = vunpack.c.l.b16 %v652
        %v800 = vunpack.c.h.b16 %v652
        %v801 = vunpack.c.l.b16 %v653
        %v802 = vunpack.c.h.b16 %v653
        %v803 = vunpack.c.l.b16 %v654
        %v804 = vunpack.c.h.b16 %v654
        %v805 = vunpack.c.l.b16 %v655
        %v806 = vunpack.c.h.b16 %v655
        %v807 = vunpack.c.l.b16 %v656
        %v808 = vunpack.c.h.b16 %v656
        %v809 = vunpack.c.l.b16 %v657
        %v810 = vunpack.c.h.b16 %v657
        %v811 = vunpack.c.l.b16 %v658
        %v812 = vunpack.c.h.b16 %v658
        %v813 = vunpack.c.l.b16 %v659
        %v814 = vunpack.c.h.b16 %v659
        %v815 = vunpack.c.l.b16 %v660
        %v816 = vunpack.c.h.b16 %v660
        %v817 = vunpack.c.l.b16 %v661
        %v818 = vunpack.c.h.b16 %v661
        %v819 = vunpack.c.l.b16 %v662
        %v820 = vunpack.c.h.b16 %v662
        %v821 = vunpack.c.l.b16 %v663
        %v822 = vunpack.c.h.b16 %v663
        %v823 = vunpack.c.l.b16 %v664
        %v824 = vunpack.c.h.b16 %v664
        %v825 = vunpack.c.l.b16 %v665
        %v826 = vunpack.c.h.b16 %v665
        %v827 = vunpack.c.l.b16 %v666
        %v828 = vunpack.c.h.b16 %v666
        %v829 = vunpack.c.l.b16 %v667
        %v830 = vunpack.c.h.b16 %v667
        %v831 = vunpack.c.l.b16 %v668
        %v832 = vunpack.c.h.b16 %v668
        %v833 = vunpack.c.l.b16 %v669
        %v834 = vunpack.c.h.b16 %v669
        %v835 = vunpack.c.l.b16 %v670
        %v836 = vunpack.c.h.b16 %v670
        %v837 = vunpack.c.l.b16 %v671
        %v838 = vunpack.c.h.b16 %v671
        %v839 = vunpack.c.l.b16 %v672
        %v840 = vunpack.c.h.b16 %v672
        %v841 = vunpack.c.l.b16 %v673
        %v842 = vunpack.c.h.b16 %v673
        %v843 = vunpack.c.l.b16 %v674
        %v844 = vunpack.c.h.b16 %v674
        %v845 = vunpack.c.l.b16 %v675
        %v846 = vunpack.c.h.b16 %v675
        %v847 = vunpack.c.l.b16 %v676
        %v848 = vunpack.c.h.b16 %v676
        %v849 = vunpack.c.l.b16 %v677
        %v850 = vunpack.c.h.b16 %v677
        %v851 = vunpack.c.l.b16 %v678
        %v852 = vunpack.c.h.b16 %v678
        %v853 = vunpack.c.l.b16 %v679
        %v854 = vunpack.c.h.b16 %v679
        %v855 = vunpack.c.l.b16 %v680
        %v856 = vunpack.c.h.b16 %v680
        %v857 = vunpack.c.l.b16 %v681
        %v858 = vunpack.c.h.b16 %v681
        %v859 = vunpack.c.l.b16 %v682
        %v860 = vunpack.c.h.b16 %v682
        %v861 = vunpack.c.l.b16 %v683
        %v862 = vunpack.c.h.b16 %v683
        %v863 = vunpack.c.l.b16 %v684
        %v864 = vunpack.c.h.b16 %v684
        %v865 = vunpack.c.l.b16 %v685
        %v866 = vunpack.c.h.b16 %v685
        %v867 = vunpack.c.l.b16 %v686
        %v868 = vunpack.c.h.b16 %v686
        %v869 = vunpack.c.l.b16 %v687
        %v870 = vunpack.c.h.b16 %v687
        %v871 = vunpack.c.l.b16 %v688
        %v872 = vunpack.c.h.b16 %v688
        %v873 = vunpack.c.l.b16 %v689
        %v874 = vunpack.c.h.b16 %v689
        %v875 = vunpack.c.l.b16 %v690
        %v876 = vunpack.c.h.b16 %v690
        %v877 = vunpack.c.l.b16 %v691
        %v878 = vunpack.c.h.b16 %v691
        %v879 = vunpack.c.l.b16 %v692
        %v880 = vunpack.c.h.b16 %v692
        %v881 = vunpack.c.l.b16 %v693
        %v882 = vunpack.c.h.b16 %v693
        %v883 = vunpack.c.l.b16 %v694
        %v884 = vunpack.c.h.b16 %v694
        %v885 = vunpack.c.l.b16 %v695
        %v886 = vunpack.c.h.b16 %v695
        %v887 = vunpack.c.l.b16 %v696
        %v888 = vunpack.c.h.b16 %v696
        %v889 = vunpack.c.l.b16 %v697
        %v890 = vunpack.c.h.b16 %v697
        %v891 = vunpack.c.l.b16 %v698
        %v892 = vunpack.c.h.b16 %v698
        %v893 = vunpack.c.l.b16 %v699
        %v894 = vunpack.c.h.b16 %v699
        %v895 = vunpack.c.l.b16 %v700
        %v896 = vunpack.c.h.b16 %v700
        %v897 = vunpack.c.l.b16 %v701
        %v898 = vunpack.c.h.b16 %v701
        %v899 = vunpack.c.l.b16 %v702
        %v900 = vunpack.c.h.b16 %v702
        %v901 = vpack.c.b16 %v775, %v773
        %v902 = vpack.c.b16 %v776, %v774
        %v903 = vpack.c.b16 %v779, %v777
        %v904 = vpack.c.b16 %v780, %v778
        %v905 = vpack.c.b16 %v783, %v781
        %v906 = vpack.c.b16 %v784, %v782
        %v907 = vpack.c.b16 %v787, %v785
        %v908 = vpack.c.b16 %v788, %v786
        %v909 = vpack.c.b16 %v791, %v789
        %v910 = vpack.c.b16 %v792, %v790
        %v911 = vpack.c.b16 %v795, %v793
        %v912 = vpack.c.b16 %v796, %v794
        %v913 = vpack.c.b16 %v799, %v797
        %v914 = vpack.c.b16 %v800, %v798
        %v915 = vpack.c.b16 %v803, %v801
        %v916 = vpack.c.b16 %v804, %v802
        %v917 = vpack.c.b16 %v807, %v805
        %v918 = vpack.c.b16 %v808, %v806
        %v919 = vpack.c.b16 %v811, %v809
        %v920 = vpack.c.b16 %v812, %v810
        %v921 = vpack.c.b16 %v815, %v813
        %v922 = vpack.c.b16 %v816, %v814
        %v923 = vpack.c.b16 %v819, %v817
        %v924 = vpack.c.b16 %v820, %v818
        %v925 = vpack.c.b16 %v823, %v821
        %v926 = vpack.c.b16 %v824, %v822
        %v927 = vpack.c.b16 %v827, %v825
        %v928 = vpack.c.b16 %v828, %v826
        %v929 = vpack.c.b16 %v831, %v829
        %v930 = vpack.c.b16 %v832, %v830
        %v931 = vpack.c.b16 %v835, %v833
        %v932 = vpack.c.b16 %v836, %v834
        %v933 = vpack.c.b16 %v839, %v837
        %v934 = vpack.c.b16 %v840, %v838
        %v935 = vpack.c.b16 %v843, %v841
        %v936 = vpack.c.b16 %v844, %v842
        %v937 = vpack.c.b16 %v847, %v845
        %v938 = vpack.c.b16 %v848, %v846
        %v939 = vpack.c.b16 %v851, %v849
        %v940 = vpack.c.b16 %v852, %v850
        %v941 = vpack.c.b16 %v855, %v853
        %v942 = vpack.c.b16 %v856, %v854
        %v943 = vpack.c.b16 %v859, %v857
        %v944 = vpack.c.b16 %v860, %v858
        %v945 = vpack.c.b16 %v863, %v861
        %v946 = vpack.c.b16 %v864, %v862
        %v947 = vpack.c.b16 %v867, %v865
        %v948 = vpack.c.b16 %v868, %v866
        %v949 = vpack.c.b16 %v871, %v869
        %v950 = vpack.c.b16 %v872, %v870
        %v951 = vpack.c.b16 %v875, %v873
        %v952 = vpack.c.b16 %v876, %v874
        %v953 = vpack.c.b16 %v879, %v877
        %v954 = vpack.c.b16 %v880, %v878
        %v955 = vpack.c.b16 %v883, %v881
        %v956 = vpack.c.b16 %v884, %v882
        %v957 = vpack.c.b16 %v887, %v885
        %v958 = vpack.c.b16 %v888, %v886
        %v959 = vpack.c.b16 %v891, %v889
        %v960 = vpack.c.b16 %v892, %v890
        %v961 = vpack.c.b16 %v895, %v893
        %v962 = vpack.c.b16 %v896, %v894
        %v963 = vpack.c.b16 %v899, %v897
        %v964 = vpack.c.b16 %v900, %v898
        %1029 = vmatpush.bf16.msra.mxu0 %v915
        %1030 = vmatpush.bf16.msra.mxu0 %v913
        %1031 = vmatpush.bf16.msra.mxu0 %v911
        %1032 = vmatpush.bf16.msra.mxu0 %v909
        %1033 = vmatpush.bf16.msra.mxu0 %v907
        %1034 = vmatpush.bf16.msra.mxu0 %v905
        %1035 = vmatpush.bf16.msra.mxu0 %v903
        %1036 = vmatpush.bf16.msra.mxu0 %v901
        %1037 = vmatmul.bf16.gmra.mxu0 %v635
        %v1038 = vpop.f32.mrf.mxu0
        %v1039 = vadd.f32 %v705, %v1038
        %v1040 = vpop.f32.mrf.mxu0
        %1041 = vdwg.mxu0
        %1042 = vmatpush.bf16.msra.mxu0 %v931
        %1043 = vmatpush.bf16.msra.mxu0 %v929
        %1044 = vmatpush.bf16.msra.mxu0 %v927
        %1045 = vmatpush.bf16.msra.mxu0 %v925
        %1046 = vmatpush.bf16.msra.mxu0 %v923
        %1047 = vmatpush.bf16.msra.mxu0 %v921
        %1048 = vmatpush.bf16.msra.mxu0 %v919
        %1049 = vmatpush.bf16.msra.mxu0 %v917
        %1050 = vmatmul.bf16.gmra.mxu0 %v636
        %v1051 = vpop.f32.mrf.mxu0
        %v1052 = vadd.f32 %v1039, %v1051
        %v1053 = vpop.f32.mrf.mxu0
        %1054 = vdwg.mxu0
        %1055 = vmatpush.bf16.msra.mxu0 %v947
        %1056 = vmatpush.bf16.msra.mxu0 %v945
        %1057 = vmatpush.bf16.msra.mxu0 %v943
        %1058 = vmatpush.bf16.msra.mxu0 %v941
        %1059 = vmatpush.bf16.msra.mxu0 %v939
        %1060 = vmatpush.bf16.msra.mxu0 %v937
        %1061 = vmatpush.bf16.msra.mxu0 %v935
        %1062 = vmatpush.bf16.msra.mxu0 %v933
        %1063 = vmatmul.bf16.gmra.mxu0 %v637
        %v1064 = vpop.f32.mrf.mxu0
        %v1065 = vadd.f32 %v1052, %v1064
        %v1066 = vpop.f32.mrf.mxu0
        %1067 = vdwg.mxu0
        %1068 = vmatpush.bf16.msra.mxu0 %v963
        %1069 = vmatpush.bf16.msra.mxu0 %v961
        %1070 = vmatpush.bf16.msra.mxu0 %v959
        %1071 = vmatpush.bf16.msra.mxu0 %v957
        %1072 = vmatpush.bf16.msra.mxu0 %v955
        %1073 = vmatpush.bf16.msra.mxu0 %v953
        %1074 = vmatpush.bf16.msra.mxu0 %v951
        %1075 = vmatpush.bf16.msra.mxu0 %v949
        %1076 = vmatmul.bf16.gmra.mxu0 %v638
        %v1077 = vpop.f32.mrf.mxu0
        %v1078 = vadd.f32 %v1065, %v1077
        %v1079 = vpop.f32.mrf.mxu0
        %1080 = vdwg.mxu0
        %1081 = vmatpush.bf16.msra.mxu0 %v916
        %1082 = vmatpush.bf16.msra.mxu0 %v914
        %1083 = vmatpush.bf16.msra.mxu0 %v912
        %1084 = vmatpush.bf16.msra.mxu0 %v910
        %1085 = vmatpush.bf16.msra.mxu0 %v908
        %1086 = vmatpush.bf16.msra.mxu0 %v906
        %1087 = vmatpush.bf16.msra.mxu0 %v904
        %1088 = vmatpush.bf16.msra.mxu0 %v902
        %1089 = vmatmul.bf16.gmra.mxu0 %v635
        %v1090 = vpop.f32.mrf.mxu0
        %v1091 = vadd.f32 %v706, %v1090
        %v1092 = vpop.f32.mrf.mxu0
        %1093 = vdwg.mxu0
        %1094 = vmatpush.bf16.msra.mxu0 %v932
        %1095 = vmatpush.bf16.msra.mxu0 %v930
        %1096 = vmatpush.bf16.msra.mxu0 %v928
        %1097 = vmatpush.bf16.msra.mxu0 %v926
        %1098 = vmatpush.bf16.msra.mxu0 %v924
        %1099 = vmatpush.bf16.msra.mxu0 %v922
        %1100 = vmatpush.bf16.msra.mxu0 %v920
        %1101 = vmatpush.bf16.msra.mxu0 %v918
        %1102 = vmatmul.bf16.gmra.mxu0 %v636
        %v1103 = vpop.f32.mrf.mxu0
        %v1104 = vadd.f32 %v1091, %v1103
        %v1105 = vpop.f32.mrf.mxu0
        %1106 = vdwg.mxu0
        %1107 = vmatpush.bf16.msra.mxu0 %v948
        %1108 = vmatpush.bf16.msra.mxu0 %v946
        %1109 = vmatpush.bf16.msra.mxu0 %v944
        %1110 = vmatpush.bf16.msra.mxu0 %v942
        %1111 = vmatpush.bf16.msra.mxu0 %v940
        %1112 = vmatpush.bf16.msra.mxu0 %v938
        %1113 = vmatpush.bf16.msra.mxu0 %v936
        %1114 = vmatpush.bf16.msra.mxu0 %v934
        %1115 = vmatmul.bf16.gmra.mxu0 %v637
        %v1116 = vpop.f32.mrf.mxu0
        %v1117 = vadd.f32 %v1104, %v1116
        %v1118 = vpop.f32.mrf.mxu0
        %1119 = vdwg.mxu0
        %1120 = vmatpush.bf16.msra.mxu0 %v964
        %1121 = vmatpush.bf16.msra.mxu0 %v962
        %1122 = vmatpush.bf16.msra.mxu0 %v960
        %1123 = vmatpush.bf16.msra.mxu0 %v958
        %1124 = vmatpush.bf16.msra.mxu0 %v956
        %1125 = vmatpush.bf16.msra.mxu0 %v954
        %1126 = vmatpush.bf16.msra.mxu0 %v952
        %1127 = vmatpush.bf16.msra.mxu0 %v950
        %1128 = vmatmul.bf16.gmra.mxu0 %v638
        %v1129 = vpop.f32.mrf.mxu0
        %v1130 = vadd.f32 %v1117, %v1129
        %v1131 = vpop.f32.mrf.mxu0
        %1132 = vdwg.mxu0
        %v1133 = vmax.f32 %v1078, 0.0
        %v1134 = vmax.f32 %v1130, 0.0
        %v1135 = vld [vmem:[#allocation11] sm:$0xff]
        %v1136 = vld [vmem:[#allocation11 + $0x8] sm:$0xff]
        %v1137 = vld [vmem:[#allocation11 + $0x10] sm:$0xff]
        %v1138 = vld [vmem:[#allocation11 + $0x18] sm:$0xff]
        %v1139 = vld [vmem:[#allocation11 + $0x20] sm:$0xff]
        %v1140 = vld [vmem:[#allocation11 + $0x28] sm:$0xff]
        %v1141 = vld [vmem:[#allocation11 + $0x30] sm:$0xff]
        %v1142 = vld [vmem:[#allocation11 + $0x38] sm:$0xff]
        %v1143 = vld [vmem:[#allocation11 + $0x40] sm:$0xff]
        %v1144 = vld [vmem:[#allocation11 + $0x48] sm:$0xff]
        %v1145 = vld [vmem:[#allocation11 + $0x50] sm:$0xff]
        %v1146 = vld [vmem:[#allocation11 + $0x58] sm:$0xff]
        %v1147 = vld [vmem:[#allocation11 + $0x60] sm:$0xff]
        %v1148 = vld [vmem:[#allocation11 + $0x68] sm:$0xff]
        %v1149 = vld [vmem:[#allocation11 + $0x70] sm:$0xff]
        %v1150 = vld [vmem:[#allocation11 + $0x78] sm:$0xff]
        %v1151 = vld [vmem:[#allocation11 + $0x80] sm:$0xff]
        %v1152 = vld [vmem:[#allocation11 + $0x88] sm:$0xff]
        %v1153 = vld [vmem:[#allocation11 + $0x90] sm:$0xff]
        %v1154 = vld [vmem:[#allocation11 + $0x98] sm:$0xff]
        %v1155 = vld [vmem:[#allocation11 + $0xa0] sm:$0xff]
        %v1156 = vld [vmem:[#allocation11 + $0xa8] sm:$0xff]
        %v1157 = vld [vmem:[#allocation11 + $0xb0] sm:$0xff]
        %v1158 = vld [vmem:[#allocation11 + $0xb8] sm:$0xff]
        %v1159 = vld [vmem:[#allocation11 + $0xc0] sm:$0xff]
        %v1160 = vld [vmem:[#allocation11 + $0xc8] sm:$0xff]
        %v1161 = vld [vmem:[#allocation11 + $0xd0] sm:$0xff]
        %v1162 = vld [vmem:[#allocation11 + $0xd8] sm:$0xff]
        %v1163 = vld [vmem:[#allocation11 + $0xe0] sm:$0xff]
        %v1164 = vld [vmem:[#allocation11 + $0xe8] sm:$0xff]
        %v1165 = vld [vmem:[#allocation11 + $0xf0] sm:$0xff]
        %v1166 = vld [vmem:[#allocation11 + $0xf8] sm:$0xff]
        %v1167 = vld [vmem:[%s6] sm:$0x1]
        %v1169 = vperm.slane %v1167, 0
        %1171 = vmatpush.msra.mxu0 %v1150
        %1172 = vmatpush.msra.mxu0 %v1149
        %1173 = vmatpush.msra.mxu0 %v1148
        %1174 = vmatpush.msra.mxu0 %v1147
        %1175 = vmatpush.msra.mxu0 %v1146
        %1176 = vmatpush.msra.mxu0 %v1145
        %1177 = vmatpush.msra.mxu0 %v1144
        %1178 = vmatpush.msra.mxu0 %v1143
        %1179 = vmatpush.msra.mxu0 %v1142
        %1180 = vmatpush.msra.mxu0 %v1141
        %1181 = vmatpush.msra.mxu0 %v1140
        %1182 = vmatpush.msra.mxu0 %v1139
        %1183 = vmatpush.msra.mxu0 %v1138
        %1184 = vmatpush.msra.mxu0 %v1137
        %1185 = vmatpush.msra.mxu0 %v1136
        %1186 = vmatpush.msra.mxu0 %v1135
        %1187 = vmatmul.f32.gmra.mxu0 %v1133
        %v1188 = vpop.f32.mrf.mxu0
        %v1189 = vadd.f32 %v1169, %v1188
        %1190 = vdwg.mxu0
        %1191 = vmatpush.msra.mxu0 %v1166
        %1192 = vmatpush.msra.mxu0 %v1165
        %1193 = vmatpush.msra.mxu0 %v1164
        %1194 = vmatpush.msra.mxu0 %v1163
        %1195 = vmatpush.msra.mxu0 %v1162
        %1196 = vmatpush.msra.mxu0 %v1161
        %1197 = vmatpush.msra.mxu0 %v1160
        %1198 = vmatpush.msra.mxu0 %v1159
        %1199 = vmatpush.msra.mxu0 %v1158
        %1200 = vmatpush.msra.mxu0 %v1157
        %1201 = vmatpush.msra.mxu0 %v1156
        %1202 = vmatpush.msra.mxu0 %v1155
        %1203 = vmatpush.msra.mxu0 %v1154
        %1204 = vmatpush.msra.mxu0 %v1153
        %1205 = vmatpush.msra.mxu0 %v1152
        %1206 = vmatpush.msra.mxu0 %v1151
        %1207 = vmatmul.f32.gmra.mxu0 %v1134
        %v1208 = vpop.f32.mrf.mxu0
        %v1209 = vadd.f32 %v1189, %v1208
        %1210 = vdwg.mxu0
        %1211 = vmax.xlane.f32.xlu0 %v1209
        %v1212 = vpop.xlane.xlu0 %1211
        %v1213 = vsub.f32 %v1209, %v1212
        %v1214 = vmul.f32 %v1213, 1.442695
        %v1215 = vpow.pop %v1214
        %1216 = vadd.xlane.f32.xlu0 %v1215
        %v1217 = vpop.xlane.xlu0 %1216
        %v1218 = vrcp.pop %v1217
        %v1219 = vmul.f32 %v1217, %v1218
        %v1220 = vsub.f32 2.0, %v1219
        %v1221 = vmul.f32 %v1218, %v1220
        %v1222 = vmul.f32 %v1215, %v1221
        %1223 = vst [vmem:[%s374] sm:$0xff] %v1222
        %s1224 = sand.u32 %s187, 1
        %s1225 = scalar_lea.sflag [#allocation4], %s1224
        %s1226 = sand.u32 %s187, 1
        %s1227 = smul.addr %s1226, 8
        %s1228 = scalar_lea.vmem [#allocation13], %s1227
        // Predicated region
        $region73: #{distribution_mapper.1} parent=47 // pred_check
          %p1229 = pneg %p197
        $region74: #{distribution_mapper.1} parent=47 // pred_check_branch
          %1231 = sbr.rel (%p1229) target = $region76
        $region75: #{distribution_mapper.1} parent=47 // pred_region
          %1233 = vsyncadd %s1225, 0
          %s1234 = smul.addr %s27, 8
          %s1235 = scalar_lea.hbm %s7, %s1234
          %s1237 = sshll.u32 %s1228, 4
          %s1238 = int_to_ptr.vmem [resolvable:$true] %s1237
          %s1239 = sshll.u32 %s1235, 4
          %s1240 = int_to_ptr.hbm [resolvable:$true] %s1239
          %1242 = dma.vmem_to_hbm [thread:$0]  %s1238, 128, %s1240, %s1225
        $region76: #{distribution_mapper.1} parent=47 // pred_fallthru
          _
      $region48: #{distribution_mapper.1} parent=5 // pred_fallthru
        _
      %p1243 = scmp.le.s32.totalorder 2, %s22
      // Predicated region
      $region77: #{distribution_mapper.1} parent=5 // pred_check
        %p1244 = pneg %p1243
      $region78: #{distribution_mapper.1} parent=5 // pred_check_branch
        %1246 = sbr.rel (%p1244) target = $region80
      $region79: #{distribution_mapper.1} parent=5 // pred_region
        %s1247 = ssub.s32 %s22, 2
        // Predicated region
        $region81: #{distribution_mapper.1} parent=79 // pred_check
          %p1248 = pneg %p203
        $region82: #{distribution_mapper.1} parent=79 // pred_check_branch
          %1250 = sbr.rel (%p1248) target = $region84
        $region83: #{distribution_mapper.1} parent=79 // pred_region
          %s1251 = sand.u32 %s188, 1
          %s1252 = scalar_lea.sflag [#allocation4], %s1251
          %s1253 = sand.u32 %s188, 1
          %s1254 = smul.addr %s1253, 8
          %s1255 = scalar_lea.vmem [#allocation13], %s1254
          %1257 = dma.done %s1252, 128
        $region84: #{distribution_mapper.1} parent=79 // pred_fallthru
          _
      $region80: #{distribution_mapper.1} parent=5 // pred_fallthru
        _
    $region6: #{distribution_mapper.1} parent=1 // loop_footer
      %s26 = sadd.s32 1, %s22
    $region7: #{distribution_mapper.1} parent=1 // loop_footer_branch
      %21 = sbr.rel target = $region3
    $region8: #{distribution_mapper.1} parent=1 // loop_exit
      _
    %1258 = vsyncpa [#allocation3], 1
    %s1259 = scalar_lea.sflag [#allocation3], 1
    %1260 = vsyncpa %s1259, 1
    %1261 = vsyncpa [#allocation6], 1
    %1262 = vsyncpa [#allocation9], 1
    %1263 = vsyncpa [#allocation12], 1
    %1264 = vsyncpa [#allocation4], 1
    %s1265 = scalar_lea.sflag [#allocation4], 1
    %1266 = vsyncpa %s1265, 1

</llo_original>
